<compile_context>
chip_gen: v5e
topology: v5e:2x2
jax: 0.10.0
libtpu: 0.0.40
codegen_flags: <defaults>
</compile_context>

<pallas_src>
import numpy as np
import jax
import jax.numpy as jnp
from jax import lax
from jax.experimental import pallas as pl
from jax.experimental.pallas import tpu as pltpu

INPUT_DIM = 1
HIDDEN_DIM = 64
OUTPUT_BINS = 50
NUM_FREQ = 16
CONST_INV_SOFTMAX = 1e-5
INIT_DENOM = 100.0            # Fourier head rescales its linear init by 1/100

FP1 = NUM_FREQ + 1            # 17
U_DIM = 2 * FP1               # 34 (re | im)
HID_PAD = 128                 # lane-padded encoder width
U_PAD = 128                   # lane-padded Fourier projection width
OUT_PAD = 128                 # lane-dense output block width (50 real bins)
XROWS = 8                     # sublane-padded K for the first-layer matmul


def _round_up(x, m):
    return (x + m - 1) // m * m


def _default_tb():
    # 128 MiB VMEM parts (v5e/v6e) take the big tile; v7x (64 MiB) stays at 1024.
    try:
        kind = jax.devices()[0].device_kind.lower()
    except Exception:
        return 1024
    return 1024 if "7" in kind else 2048


# --------------------------------------------------------------------------- #
# kernel
# --------------------------------------------------------------------------- #
def gmm_kernel(x8_ref, w1p_ref, w2p_ref, b2p_ref, wfp_ref, bfp_ref, trig_ref,
               out_ref):
    # ---- layer 1: lane-major x, transposed-LHS K=8 matmul, bias folded ------
    # x8 rows: [x ; ones ; zeros...]; w1p rows: [w1 ; b1 ; zeros...]
    #   h1[b, j] = x[b]*w1[j] + b1[j]          (exact, f32)
    h1 = lax.dot_general(x8_ref[...], w1p_ref[...],
                         dimension_numbers=(((0,), (0,)), ((), ())),
                         preferred_element_type=jnp.float32)        # (TB, 128)
    h1 = jnp.maximum(h1, 0.0)

    # ---- layer 2: bf16 operands, f32 accumulation ----------------------------
    h2 = jnp.dot(h1.astype(jnp.bfloat16), w2p_ref[...],
                 preferred_element_type=jnp.float32) + b2p_ref[...]
    h2 = jnp.maximum(h2, 0.0)                                        # (TB, 128)

    # ---- Fourier projection (lanes >= 2*(F+1) are exactly zero) --------------
    u = jnp.dot(h2.astype(jnp.bfloat16), wfp_ref[...],
                preferred_element_type=jnp.float32) + bfp_ref[...]   # (TB, 128)

    # Re(r0) = sum_n |a_n|^2 = sum of squares over all (zero-padded) lanes.
    r0 = jnp.sum(u * u, axis=1, keepdims=True)                       # (TB, 1)

    # A(m_j) = sum_n a_n exp(i*pi*n*m_j): one bf16 matmul gives [Re A | Im A]
    # in lane blocks [0:128) and [128:256) (tile-aligned slices are free).
    a_ri = jnp.dot(u.astype(jnp.bfloat16), trig_ref[...],
                   preferred_element_type=jnp.float32)               # (TB, 256)
    a_re = a_ri[:, :OUT_PAD]
    a_im = a_ri[:, OUT_PAD:]

    # 1/(2*r0): EUP approximate reciprocal + one Newton step (~1e-7 rel err).
    # Floor keeps padded batch rows finite (p >= 0 always in this formulation).
    denom = jnp.maximum(2.0 * r0, 1e-20)
    inv = pl.reciprocal(denom, approx=True)
    inv = inv * (2.0 - denom * inv)

    p = (a_re * a_re + a_im * a_im) * inv        # padded output lanes get p = 0

    # multinomial over the bins, then inverse-softmax (log); lane-dense store.
    out_ref[...] = jnp.log(p * (2.0 / OUTPUT_BINS)
                           + CONST_INV_SOFTMAX).astype(out_ref.dtype)


# --------------------------------------------------------------------------- #
# wrapper
# --------------------------------------------------------------------------- #
def gmm_forward(x, params, tb=None, out_dtype=jnp.float32):
    assert x.ndim == 2 and x.shape[1] == INPUT_DIM
    w1p, w2p, b2p = params["w1p"], params["w2p"], params["b2p"]
    wfp, bfp, trig = params["wfp"], params["bfp"], params["trig"]

    B = x.shape[0]
    if tb is None:
        tb = _default_tb()
    tb = max(8, min(int(tb), _round_up(B, 8)))
    tb = _round_up(tb, 8)
    # force >= 2 grid tiles for big batches so both v7x TensorCores get work
    if _round_up(B, tb) // tb < 2 and B >= 256:
        tb = _round_up((B + 1) // 2, 8)
    B_pad = _round_up(B, tb)
    G = B_pad // tb

    # lane-dense x: (G, 8, TB) with row 0 = x, row 1 = ones (bias), rest zero.
    xv = jnp.pad(x.reshape(B).astype(jnp.float32), (0, B_pad - B))
    xg = xv.reshape(G, 1, tb)
    x8 = jnp.concatenate(
        [xg, jnp.ones_like(xg), jnp.zeros((G, XROWS - 2, tb), jnp.float32)],
        axis=1)                                                   # (G, 8, TB)

    def resident(arr):
        nd = arr.ndim
        return pl.BlockSpec(arr.shape, lambda i, _n=nd: (0,) * _n)

    out = pl.pallas_call(
        gmm_kernel,
        out_shape=jax.ShapeDtypeStruct((B_pad, OUT_PAD), out_dtype),
        grid_spec=pltpu.PrefetchScalarGridSpec(
            num_scalar_prefetch=0,
            grid=(G,),
            in_specs=[
                pl.BlockSpec((None, XROWS, tb), lambda i: (i, 0, 0)),
                resident(w1p), resident(w2p), resident(b2p),
                resident(wfp), resident(bfp), resident(trig),
            ],
            out_specs=pl.BlockSpec((tb, OUT_PAD), lambda i: (i, 0)),
        ),
        compiler_params=pltpu.CompilerParams(
            dimension_semantics=("parallel",),        # batch tiles shard on v7x TCs
            vmem_limit_bytes=32 * 1024 * 1024),
    )(x8, w1p, w2p, b2p, wfp, bfp, trig)

    return out[:B, :OUTPUT_BINS]


# --------------------------------------------------------------------------- #
# init (PyTorch-style uniform +-1/sqrt(fan_in)) + precomputed padded tables
# --------------------------------------------------------------------------- #
def init_params(key):
    ks = jax.random.split(key, 6)

    def linear(kw, kb, fan_in, fan_out):
        bound = 1.0 / (fan_in ** 0.5)
        w = jax.random.uniform(kw, (fan_in, fan_out), jnp.float32, -bound, bound)
        b = jax.random.uniform(kb, (1, fan_out), jnp.float32, -bound, bound)
        return np.asarray(w), np.asarray(b)

    w1, b1 = linear(ks[0], ks[1], INPUT_DIM, HIDDEN_DIM)
    w2, b2 = linear(ks[2], ks[3], HIDDEN_DIM, HIDDEN_DIM)
    wf, bf = linear(ks[4], ks[5], HIDDEN_DIM, U_DIM)
    wf = wf / INIT_DENOM
    bf = bf / INIT_DENOM

    def bf16_round(a):  # round once; kernel (bf16) and reference (f32) share values
        return np.asarray(jnp.asarray(a, jnp.bfloat16).astype(jnp.float32))

    w2 = bf16_round(w2)
    wf = bf16_round(wf)

    # ---- padded kernel tables ------------------------------------------------
    w1p = np.zeros((XROWS, HID_PAD), np.float32)
    w1p[0, :HIDDEN_DIM] = w1[0]
    w1p[1, :HIDDEN_DIM] = b1[0]
    w2p = np.zeros((HID_PAD, HID_PAD), np.float32)
    w2p[:HIDDEN_DIM, :HIDDEN_DIM] = w2
    b2p = np.zeros((1, HID_PAD), np.float32)
    b2p[0, :HIDDEN_DIM] = b2[0]
    wfp = np.zeros((HID_PAD, U_PAD), np.float32)
    wfp[:HIDDEN_DIM, :U_DIM] = wf
    bfp = np.zeros((1, U_PAD), np.float32)
    bfp[0, :U_DIM] = bf[0]

    # ---- trig table: A(m_j) = sum_n a_n exp(i*pi*n*m_j) at bin centers --------
    edges = np.linspace(-1.0, 1.0, OUTPUT_BINS + 1)
    centers = (edges[:-1] + edges[1:]) / 2.0
    nn = np.arange(FP1, dtype=np.float64)
    theta = np.pi * nn[:, None] * centers[None, :]              # (17, 50)
    cos_n = bf16_round(np.cos(theta).astype(np.float32))
    sin_n = bf16_round(np.sin(theta).astype(np.float32))

    trig = np.zeros((U_PAD, 2 * OUT_PAD), np.float32)
    trig[:FP1, :OUTPUT_BINS] = cos_n                            # Re: +re*cos
    trig[FP1:U_DIM, :OUTPUT_BINS] = -sin_n                      # Re: -im*sin
    trig[:FP1, OUT_PAD:OUT_PAD + OUTPUT_BINS] = sin_n           # Im: +re*sin
    trig[FP1:U_DIM, OUT_PAD:OUT_PAD + OUTPUT_BINS] = cos_n      # Im: +im*cos

    return {
        # f32 reference weights (same values the kernel sees, bf16-rounded)
        "w1": jnp.asarray(w1), "b1": jnp.asarray(b1),
        "w2": jnp.asarray(w2), "b2": jnp.asarray(b2),
        "wf": jnp.asarray(wf), "bf": jnp.asarray(bf),
        "cos_k": jnp.asarray(cos_n[1:]), "sin_k": jnp.asarray(sin_n[1:]),
        # kernel-side padded tables (matmul weights in bf16, biases in f32)
        "w1p": jnp.asarray(w1p),
        "w2p": jnp.asarray(w2p, jnp.bfloat16),
        "b2p": jnp.asarray(b2p),
        "wfp": jnp.asarray(wfp, jnp.bfloat16),
        "bfp": jnp.asarray(bfp),
        "trig": jnp.asarray(trig, jnp.bfloat16),
    }


# --------------------------------------------------------------------------- #
# pure-JAX reference (autocorrelation formulation -> independent check of the
# |A|^2 identity used by the kernel)
# --------------------------------------------------------------------------- #
def gmm_forward_ref(x, params):
    hp = lax.Precision.HIGHEST
    h = jnp.maximum(x @ params["w1"] + params["b1"], 0.0)
    h = jnp.maximum(jnp.dot(h, params["w2"], precision=hp) + params["b2"], 0.0)
    u = jnp.dot(h, params["wf"], precision=hp) + params["bf"]
    F = NUM_FREQ
    a = u[:, :F + 1] + 1j * u[:, F + 1:]
    r = jnp.stack(
        [jnp.sum(a[:, k:] * jnp.conj(a[:, :F + 1 - k]), axis=1)
         for k in range(F + 1)], axis=1)
    c = r[:, 1:] / jnp.real(r[:, 0:1])
    p = 0.5 + (jnp.dot(jnp.real(c), params["cos_k"], precision=hp)
               - jnp.dot(jnp.imag(c), params["sin_k"], precision=hp))
    return jnp.log(p * (2.0 / OUTPUT_BINS) + CONST_INV_SOFTMAX)


if __name__ == "__main__":
    key = jax.random.PRNGKey(0)
    pkey, xkey = jax.random.split(key)
    params = init_params(pkey)

    B = 16
    x = jax.random.normal(xkey, (B, INPUT_DIM), dtype=jnp.float32)

    # tb=8 -> 2 grid steps, exercising the batch tiling / index maps
    out = jax.block_until_ready(gmm_forward(x, params, tb=8))
    assert out.shape == (B, OUTPUT_BINS)
    assert bool(jnp.all(jnp.isfinite(out)))

    ref = gmm_forward_ref(x, params)
    # probabilities: linear-error domain for the bf16 matmul casts
    pd = float(jnp.max(jnp.abs(jnp.exp(out) - jnp.exp(ref))))
    assert bool(jnp.allclose(jnp.exp(out), jnp.exp(ref), atol=5e-4, rtol=3e-2)), pd
    # logits: log() amplifies error only where p ~ eps, where |ref| is large
    ld = float(jnp.max(jnp.abs(out - ref)))
    assert bool(jnp.allclose(out, ref, atol=5e-2, rtol=5e-2)), ld

    print("KERNEL_OK")
</pallas_src>

<mosaic_0001>
module attributes {stable_mosaic.version = 11 : i64} {
  func.func @gmm_kernel(%arg0: i32, %arg1: memref<1x8x8xf32, #tpu.memory_space<vmem>>, %arg2: memref<8x128xf32, #tpu.memory_space<vmem>>, %arg3: memref<128x128xbf16, #tpu.memory_space<vmem>>, %arg4: memref<1x128xf32, #tpu.memory_space<vmem>>, %arg5: memref<128x128xbf16, #tpu.memory_space<vmem>>, %arg6: memref<1x128xf32, #tpu.memory_space<vmem>>, %arg7: memref<128x256xbf16, #tpu.memory_space<vmem>>, %arg8: memref<8x128xf32, #tpu.memory_space<vmem>>) attributes {dimension_semantics = [#tpu.dimension_semantics<parallel>], iteration_bounds = array<i64: 2>, scalar_prefetch = 0 : i64, scratch_operands = 0 : i64, tpu.core_type = #tpu.core_type<tc>, window_params = [{transform_indices = @transform_0, window_bounds = array<i64: 1, 8, 8>}, {pipeline_mode = #tpu.pipeline_mode<synchronous>, transform_indices = @transform_1, window_bounds = array<i64: 8, 128>}, {pipeline_mode = #tpu.pipeline_mode<synchronous>, transform_indices = @transform_2, window_bounds = array<i64: 128, 128>}, {pipeline_mode = #tpu.pipeline_mode<synchronous>, transform_indices = @transform_3, window_bounds = array<i64: 1, 128>}, {pipeline_mode = #tpu.pipeline_mode<synchronous>, transform_indices = @transform_4, window_bounds = array<i64: 128, 128>}, {pipeline_mode = #tpu.pipeline_mode<synchronous>, transform_indices = @transform_5, window_bounds = array<i64: 1, 128>}, {pipeline_mode = #tpu.pipeline_mode<synchronous>, transform_indices = @transform_6, window_bounds = array<i64: 128, 256>}, {transform_indices = @transform_7, window_bounds = array<i64: 8, 128>}]} {
    %c0 = arith.constant 0 : index
    %c0_0 = arith.constant 0 : index
    %c0_1 = arith.constant 0 : index
    %0 = vector.load %arg1[%c0, %c0_0, %c0_1] : memref<1x8x8xf32, #tpu.memory_space<vmem>>, vector<1x8x8xf32>
    %1 = vector.shape_cast %0 : vector<1x8x8xf32> to vector<8x8xf32>
    %c0_2 = arith.constant 0 : index
    %c0_3 = arith.constant 0 : index
    %2 = vector.load %arg2[%c0_2, %c0_3] : memref<8x128xf32, #tpu.memory_space<vmem>>, vector<8x128xf32>
    %cst = arith.constant dense<0.000000e+00> : vector<8x128xf32>
    %3 = tpu.matmul %1, %2, %cst {dimension_numbers = #tpu.dot_dimension_numbers<[0], [0], [1], [1], [0, 1, 1, 1], [], []>} : vector<8x8xf32>, vector<8x128xf32>, vector<8x128xf32> -> vector<8x128xf32>
    %cst_4 = arith.constant 0.000000e+00 : f32
    %4 = vector.broadcast %cst_4 : f32 to vector<8x128xf32>
    %5 = arith.maximumf %3, %4 : vector<8x128xf32>
    %6 = arith.truncf %5 : vector<8x128xf32> to vector<8x128xbf16>
    %c0_5 = arith.constant 0 : index
    %c0_6 = arith.constant 0 : index
    %7 = vector.load %arg3[%c0_5, %c0_6] : memref<128x128xbf16, #tpu.memory_space<vmem>>, vector<128x128xbf16>
    %cst_7 = arith.constant dense<0.000000e+00> : vector<8x128xf32>
    %8 = tpu.matmul %6, %7, %cst_7 {dimension_numbers = #tpu.dot_dimension_numbers<[1], [0], [0], [1], [0, 0, 1, 1], [], []>} : vector<8x128xbf16>, vector<128x128xbf16>, vector<8x128xf32> -> vector<8x128xf32>
    %c0_8 = arith.constant 0 : index
    %c0_9 = arith.constant 0 : index
    %9 = vector.load %arg4[%c0_8, %c0_9] : memref<1x128xf32, #tpu.memory_space<vmem>>, vector<1x128xf32>
    %10 = vector.broadcast %9 : vector<1x128xf32> to vector<8x128xf32>
    %11 = arith.addf %8, %10 : vector<8x128xf32>
    %cst_10 = arith.constant 0.000000e+00 : f32
    %12 = vector.broadcast %cst_10 : f32 to vector<8x128xf32>
    %13 = arith.maximumf %11, %12 : vector<8x128xf32>
    %14 = arith.truncf %13 : vector<8x128xf32> to vector<8x128xbf16>
    %c0_11 = arith.constant 0 : index
    %c0_12 = arith.constant 0 : index
    %15 = vector.load %arg5[%c0_11, %c0_12] : memref<128x128xbf16, #tpu.memory_space<vmem>>, vector<128x128xbf16>
    %cst_13 = arith.constant dense<0.000000e+00> : vector<8x128xf32>
    %16 = tpu.matmul %14, %15, %cst_13 {dimension_numbers = #tpu.dot_dimension_numbers<[1], [0], [0], [1], [0, 0, 1, 1], [], []>} : vector<8x128xbf16>, vector<128x128xbf16>, vector<8x128xf32> -> vector<8x128xf32>
    %c0_14 = arith.constant 0 : index
    %c0_15 = arith.constant 0 : index
    %17 = vector.load %arg6[%c0_14, %c0_15] : memref<1x128xf32, #tpu.memory_space<vmem>>, vector<1x128xf32>
    %18 = vector.broadcast %17 : vector<1x128xf32> to vector<8x128xf32>
    %19 = arith.addf %16, %18 : vector<8x128xf32>
    %20 = arith.mulf %19, %19 : vector<8x128xf32>
    %cst_16 = arith.constant dense<0.000000e+00> : vector<8xf32>
    %21 = vector.multi_reduction <add>, %20, %cst_16 [1] : vector<8x128xf32> to vector<8xf32>
    %22 = vector.shape_cast %21 : vector<8xf32> to vector<8x1xf32>
    %23 = arith.truncf %19 : vector<8x128xf32> to vector<8x128xbf16>
    %c0_17 = arith.constant 0 : index
    %c0_18 = arith.constant 0 : index
    %24 = vector.load %arg7[%c0_17, %c0_18] : memref<128x256xbf16, #tpu.memory_space<vmem>>, vector<128x256xbf16>
    %cst_19 = arith.constant dense<0.000000e+00> : vector<8x256xf32>
    %25 = tpu.matmul %23, %24, %cst_19 {dimension_numbers = #tpu.dot_dimension_numbers<[1], [0], [0], [1], [0, 0, 1, 1], [], []>} : vector<8x128xbf16>, vector<128x256xbf16>, vector<8x256xf32> -> vector<8x256xf32>
    %26 = vector.extract_strided_slice %25 {offsets = [0, 0], sizes = [8, 128], strides = [1, 1]} : vector<8x256xf32> to vector<8x128xf32>
    %27 = vector.extract_strided_slice %25 {offsets = [0, 128], sizes = [8, 128], strides = [1, 1]} : vector<8x256xf32> to vector<8x128xf32>
    %cst_20 = arith.constant 2.000000e+00 : f32
    %28 = vector.broadcast %cst_20 : f32 to vector<8x1xf32>
    %29 = arith.mulf %28, %22 : vector<8x1xf32>
    %cst_21 = arith.constant 9.99999968E-21 : f32
    %30 = vector.broadcast %cst_21 : f32 to vector<8x1xf32>
    %31 = arith.maximumf %29, %30 : vector<8x1xf32>
    %32 = tpu.reciprocal %31 {approx = true} : vector<8x1xf32> -> vector<8x1xf32>
    %33 = arith.mulf %31, %32 : vector<8x1xf32>
    %cst_22 = arith.constant 2.000000e+00 : f32
    %34 = vector.broadcast %cst_22 : f32 to vector<8x1xf32>
    %35 = arith.subf %34, %33 : vector<8x1xf32>
    %36 = arith.mulf %32, %35 : vector<8x1xf32>
    %37 = arith.mulf %26, %26 : vector<8x128xf32>
    %38 = arith.mulf %27, %27 : vector<8x128xf32>
    %39 = arith.addf %37, %38 : vector<8x128xf32>
    %40 = vector.broadcast %36 : vector<8x1xf32> to vector<8x128xf32>
    %41 = arith.mulf %39, %40 : vector<8x128xf32>
    %cst_23 = arith.constant 4.000000e-02 : f32
    %42 = vector.broadcast %cst_23 : f32 to vector<8x128xf32>
    %43 = arith.mulf %41, %42 : vector<8x128xf32>
    %cst_24 = arith.constant 9.99999974E-6 : f32
    %44 = vector.broadcast %cst_24 : f32 to vector<8x128xf32>
    %45 = arith.addf %43, %44 : vector<8x128xf32>
    %46 = math.log %45 : vector<8x128xf32>
    %c0_25 = arith.constant 0 : index
    %c0_26 = arith.constant 0 : index
    %47 = vector.load %arg8[%c0_25, %c0_26] : memref<8x128xf32, #tpu.memory_space<vmem>>, vector<8x128xf32>
    tpu.vector_store %arg8[%c0_25, %c0_26], %46 {strides = array<i32>} : memref<8x128xf32, #tpu.memory_space<vmem>>, vector<8x128xf32>,
    return
  }
  func.func @transform_0(%arg0: i32) -> (i32, i32, i32) {
    %c0_i32 = arith.constant 0 : i32
    %c0_i32_0 = arith.constant 0 : i32
    %c0_i32_1 = arith.constant 0 : i32
    return %arg0, %c0_i32, %c0_i32_0 : i32, i32, i32
  }
  func.func @transform_1(%arg0: i32) -> (i32, i32) {
    %c0_i32 = arith.constant 0 : i32
    %c0_i32_0 = arith.constant 0 : i32
    %c0_i32_1 = arith.constant 0 : i32
    return %c0_i32, %c0_i32_0 : i32, i32
  }
  func.func @transform_2(%arg0: i32) -> (i32, i32) {
    %c0_i32 = arith.constant 0 : i32
    %c0_i32_0 = arith.constant 0 : i32
    %c0_i32_1 = arith.constant 0 : i32
    return %c0_i32, %c0_i32_0 : i32, i32
  }
  func.func @transform_3(%arg0: i32) -> (i32, i32) {
    %c0_i32 = arith.constant 0 : i32
    %c0_i32_0 = arith.constant 0 : i32
    %c0_i32_1 = arith.constant 0 : i32
    return %c0_i32, %c0_i32_0 : i32, i32
  }
  func.func @transform_4(%arg0: i32) -> (i32, i32) {
    %c0_i32 = arith.constant 0 : i32
    %c0_i32_0 = arith.constant 0 : i32
    %c0_i32_1 = arith.constant 0 : i32
    return %c0_i32, %c0_i32_0 : i32, i32
  }
  func.func @transform_5(%arg0: i32) -> (i32, i32) {
    %c0_i32 = arith.constant 0 : i32
    %c0_i32_0 = arith.constant 0 : i32
    %c0_i32_1 = arith.constant 0 : i32
    return %c0_i32, %c0_i32_0 : i32, i32
  }
  func.func @transform_6(%arg0: i32) -> (i32, i32) {
    %c0_i32 = arith.constant 0 : i32
    %c0_i32_0 = arith.constant 0 : i32
    %c0_i32_1 = arith.constant 0 : i32
    return %c0_i32, %c0_i32_0 : i32, i32
  }
  func.func @transform_7(%arg0: i32) -> (i32, i32) {
    %c0_i32 = arith.constant 0 : i32
    %c0_i32_0 = arith.constant 0 : i32
    return %arg0, %c0_i32 : i32, i32
  }
}

</mosaic_0001>

<llo_original>
// kernel: tpu_custom_call.1
$region0: #{tpu_custom_call.1}
  #allocation0 [shape = 'u32[]', space=smem, size = 0x4, offset = 0x4, fixed_abs, tag = 'smem constant byte address 0x4 - core index']
  #allocation1 [shape = 'u32[72,128]{1,0:T(1,128)}', space=vmem, size = 0x9000, scoped, tag = 'internal scratch']
  %s0 = inlined_call_operand.hbm [shape: f32[2,8,8], index: 0, kind: input, shape index: {}]
  %s1 = inlined_call_operand.hbm [shape: f32[8,128], index: 1, kind: input, shape index: {}]
  %s2 = inlined_call_operand.hbm [shape: bf16[128,128], index: 2, kind: input, shape index: {}]
  %s3 = inlined_call_operand.vmem [shape: f32[1,128], index: 3, kind: input, shape index: {}]
  %s4 = inlined_call_operand.hbm [shape: bf16[128,128], index: 4, kind: input, shape index: {}]
  %s5 = inlined_call_operand.vmem [shape: f32[1,128], index: 5, kind: input, shape index: {}]
  %s6 = inlined_call_operand.hbm [shape: bf16[128,256], index: 6, kind: input, shape index: {}]
  %s7 = inlined_call_operand.hbm [shape: f32[16,128], index: 7, kind: output, shape index: {}]
  %s8 = sld [smem:[#allocation0]]
  $region81: #{tpu_custom_call.1} parent=0
    _
  %s10 = ssub.s32 1, %s8
  %s11 = scalar_select 0, %s10, %s8
  $region1: #{tpu_custom_call.1} parent=0
    #allocation2 [shape = 'u8[8192]{0}', space=vmem, size = 0x2000, scoped, tag = 'input window, operand 0']
    #allocation3 [shape = 's32[2]{0}', space=sflag, size = 0x8, scoped, tag = 'scoped memory for tpu_custom_call.1']
    #allocation4 [shape = 's32[2]{0}', space=sflag, size = 0x8, scoped, tag = 'scoped memory for tpu_custom_call.1']
    #allocation5 [shape = 'u8[4096]{0}', space=vmem, size = 0x1000, scoped, tag = 'input window, operand 1, single buffered']
    #allocation6 [shape = 's32[1]{0}', space=sflag, size = 0x4, scoped, tag = 'scoped memory for tpu_custom_call.1']
    #allocation7 [shape = 'u8[32768]{0}', space=vmem, size = 0x8000, scoped, tag = 'input window, operand 2, single buffered']
    #allocation8 [shape = 'u8[32768]{0}', space=vmem, size = 0x8000, scoped, tag = 'input window, operand 4, single buffered']
    #allocation9 [shape = 's32[1]{0}', space=sflag, size = 0x4, scoped, tag = 'scoped memory for tpu_custom_call.1']
    #allocation10 [shape = 'u8[65536]{0}', space=vmem, size = 0x10000, scoped, tag = 'input window, operand 6, single buffered']
    #allocation11 [shape = 'u8[8192]{0}', space=vmem, size = 0x2000, scoped, tag = 'output window, operand 0']
    %12 = vsyncpa [#allocation3], 0
    %s13 = scalar_lea.sflag [#allocation3], 1
    %14 = vsyncpa %s13, 0
    %15 = vsyncpa [#allocation6], 0
    %16 = vsyncpa [#allocation9], 0
    %17 = vsyncpa [#allocation4], 0
    %s18 = scalar_lea.sflag [#allocation4], 1
    %19 = vsyncpa %s18, 0
    loop: start=0, step=1, limit=4
    $region2: #{tpu_custom_call.1} parent=1 // loop_pre_header
      _
    $region3: #{tpu_custom_call.1} parent=1 // loop_header
      %s21 = sphi 0, %s25
      %p22 = scmp.ge.s32.totalorder %s21, 4
      %s31 = sphi 0, %s33
      %s34 = sphi 0, %s31
      %s35 = sphi 0, %s34
      %s51 = sphi 0, %s35
      %s55 = sphi 0, %s55
      %s57 = sphi 0, %s55
      %s58 = sphi 0, %s57
      %s72 = sphi 0, %s58
      %s76 = sphi 0, %s76
      %s78 = sphi 0, %s76
      %s79 = sphi 0, %s78
      %s93 = sphi 0, %s79
      %s97 = sphi 0, %s97
      %s99 = sphi 0, %s97
      %s100 = sphi 0, %s99
      %s114 = sphi 0, %s100
      %s118 = sphi 0, %s118
      %s120 = sphi 0, %s118
      %s121 = sphi 0, %s120
      %s135 = sphi 0, %s121
      %s139 = sphi 0, %s139
      %s141 = sphi 0, %s139
      %s142 = sphi 0, %s141
      %s156 = sphi 0, %s142
      %s160 = sphi 0, %s160
      %s162 = sphi 0, %s160
      %s163 = sphi 0, %s162
      %s177 = sphi 0, %s163
      %s183 = sphi 0, %s185
      %s186 = sphi 0, %s183
      %s187 = sphi 0, %s186
      %s203 = sphi 0, %s187
    $region4: #{tpu_custom_call.1} parent=1 // loop_header_branch
      %24 = sbr.rel (%p22) target = $region8
    $region5: #{tpu_custom_call.1} parent=1 // loop_body
      %s26 = ssub.s32 %s21, 1
      %s27 = ssub.s32 %s21, 2
      %s28 = sadd.s32 %s21, 1
      %s29 = ssub.s32 %s21, %s28
      %p30 = scmp.eq.s32.totalorder %s29, 0
      %s32 = sadd.s32 %s31, 1
      %s33 = scalar_select %p30, %s31, %s32
      %p36 = pneg %p30
      %p37 = scmp.eq.s32.totalorder %s21, 1
      %p38 = por %p36, %p37
      %p39 = scmp.ne.s32.totalorder %s31, %s34
      %p40 = scmp.eq.s32.totalorder %s21, 0
      %p41 = por %p39, %p40
      %p42 = scmp.ne.s32.totalorder %s31, %s34
      %p43 = scmp.eq.s32.totalorder %s26, 1
      %p44 = por %p42, %p43
      %p45 = scmp.ne.s32.totalorder %s34, %s35
      %p46 = scmp.eq.s32.totalorder %s26, 0
      %p47 = por %p45, %p46
      %p48 = scmp.ne.s32.totalorder %s34, %s35
      %p49 = scmp.eq.s32.totalorder %s27, 1
      %p50 = por %p48, %p49
      %p52 = scmp.ne.s32.totalorder %s35, %s51
      %p53 = scmp.eq.s32.totalorder %s27, 0
      %p54 = por %p52, %p53
      %s56 = sadd.s32 %s55, 1
      %p59 = scmp.eq.s32.totalorder %s21, 1
      %p60 = scmp.ne.s32.totalorder %s55, %s57
      %p61 = scmp.eq.s32.totalorder %s21, 0
      %p62 = por %p60, %p61
      %p63 = scmp.ne.s32.totalorder %s55, %s57
      %p64 = scmp.eq.s32.totalorder %s26, 1
      %p65 = por %p63, %p64
      %p66 = scmp.ne.s32.totalorder %s57, %s58
      %p67 = scmp.eq.s32.totalorder %s26, 0
      %p68 = por %p66, %p67
      %p69 = scmp.ne.s32.totalorder %s57, %s58
      %p70 = scmp.eq.s32.totalorder %s27, 1
      %p71 = por %p69, %p70
      %p73 = scmp.ne.s32.totalorder %s58, %s72
      %p74 = scmp.eq.s32.totalorder %s27, 0
      %p75 = por %p73, %p74
      %s77 = sadd.s32 %s76, 1
      %p80 = scmp.eq.s32.totalorder %s21, 1
      %p81 = scmp.ne.s32.totalorder %s76, %s78
      %p82 = scmp.eq.s32.totalorder %s21, 0
      %p83 = por %p81, %p82
      %p84 = scmp.ne.s32.totalorder %s76, %s78
      %p85 = scmp.eq.s32.totalorder %s26, 1
      %p86 = por %p84, %p85
      %p87 = scmp.ne.s32.totalorder %s78, %s79
      %p88 = scmp.eq.s32.totalorder %s26, 0
      %p89 = por %p87, %p88
      %p90 = scmp.ne.s32.totalorder %s78, %s79
      %p91 = scmp.eq.s32.totalorder %s27, 1
      %p92 = por %p90, %p91
      %p94 = scmp.ne.s32.totalorder %s79, %s93
      %p95 = scmp.eq.s32.totalorder %s27, 0
      %p96 = por %p94, %p95
      %s98 = sadd.s32 %s97, 1
      %p101 = scmp.eq.s32.totalorder %s21, 1
      %p102 = scmp.ne.s32.totalorder %s97, %s99
      %p103 = scmp.eq.s32.totalorder %s21, 0
      %p104 = por %p102, %p103
      %p105 = scmp.ne.s32.totalorder %s97, %s99
      %p106 = scmp.eq.s32.totalorder %s26, 1
      %p107 = por %p105, %p106
      %p108 = scmp.ne.s32.totalorder %s99, %s100
      %p109 = scmp.eq.s32.totalorder %s26, 0
      %p110 = por %p108, %p109
      %p111 = scmp.ne.s32.totalorder %s99, %s100
      %p112 = scmp.eq.s32.totalorder %s27, 1
      %p113 = por %p111, %p112
      %p115 = scmp.ne.s32.totalorder %s100, %s114
      %p116 = scmp.eq.s32.totalorder %s27, 0
      %p117 = por %p115, %p116
      %s119 = sadd.s32 %s118, 1
      %p122 = scmp.eq.s32.totalorder %s21, 1
      %p123 = scmp.ne.s32.totalorder %s118, %s120
      %p124 = scmp.eq.s32.totalorder %s21, 0
      %p125 = por %p123, %p124
      %p126 = scmp.ne.s32.totalorder %s118, %s120
      %p127 = scmp.eq.s32.totalorder %s26, 1
      %p128 = por %p126, %p127
      %p129 = scmp.ne.s32.totalorder %s120, %s121
      %p130 = scmp.eq.s32.totalorder %s26, 0
      %p131 = por %p129, %p130
      %p132 = scmp.ne.s32.totalorder %s120, %s121
      %p133 = scmp.eq.s32.totalorder %s27, 1
      %p134 = por %p132, %p133
      %p136 = scmp.ne.s32.totalorder %s121, %s135
      %p137 = scmp.eq.s32.totalorder %s27, 0
      %p138 = por %p136, %p137
      %s140 = sadd.s32 %s139, 1
      %p143 = scmp.eq.s32.totalorder %s21, 1
      %p144 = scmp.ne.s32.totalorder %s139, %s141
      %p145 = scmp.eq.s32.totalorder %s21, 0
      %p146 = por %p144, %p145
      %p147 = scmp.ne.s32.totalorder %s139, %s141
      %p148 = scmp.eq.s32.totalorder %s26, 1
      %p149 = por %p147, %p148
      %p150 = scmp.ne.s32.totalorder %s141, %s142
      %p151 = scmp.eq.s32.totalorder %s26, 0
      %p152 = por %p150, %p151
      %p153 = scmp.ne.s32.totalorder %s141, %s142
      %p154 = scmp.eq.s32.totalorder %s27, 1
      %p155 = por %p153, %p154
      %p157 = scmp.ne.s32.totalorder %s142, %s156
      %p158 = scmp.eq.s32.totalorder %s27, 0
      %p159 = por %p157, %p158
      %s161 = sadd.s32 %s160, 1
      %p164 = scmp.eq.s32.totalorder %s21, 1
      %p165 = scmp.ne.s32.totalorder %s160, %s162
      %p166 = scmp.eq.s32.totalorder %s21, 0
      %p167 = por %p165, %p166
      %p168 = scmp.ne.s32.totalorder %s160, %s162
      %p169 = scmp.eq.s32.totalorder %s26, 1
      %p170 = por %p168, %p169
      %p171 = scmp.ne.s32.totalorder %s162, %s163
      %p172 = scmp.eq.s32.totalorder %s26, 0
      %p173 = por %p171, %p172
      %p174 = scmp.ne.s32.totalorder %s162, %s163
      %p175 = scmp.eq.s32.totalorder %s27, 1
      %p176 = por %p174, %p175
      %p178 = scmp.ne.s32.totalorder %s163, %s177
      %p179 = scmp.eq.s32.totalorder %s27, 0
      %p180 = por %p178, %p179
      %s181 = ssub.s32 %s21, %s28
      %p182 = scmp.eq.s32.totalorder %s181, 0
      %s184 = sadd.s32 %s183, 1
      %s185 = scalar_select %p182, %s183, %s184
      %p188 = pneg %p182
      %p189 = scmp.eq.s32.totalorder %s21, 1
      %p190 = por %p188, %p189
      %p191 = scmp.ne.s32.totalorder %s183, %s186
      %p192 = scmp.eq.s32.totalorder %s21, 0
      %p193 = por %p191, %p192
      %p194 = scmp.ne.s32.totalorder %s183, %s186
      %p195 = scmp.eq.s32.totalorder %s26, 1
      %p196 = por %p194, %p195
      %p197 = scmp.ne.s32.totalorder %s186, %s187
      %p198 = scmp.eq.s32.totalorder %s26, 0
      %p199 = por %p197, %p198
      %p200 = scmp.ne.s32.totalorder %s186, %s187
      %p201 = scmp.eq.s32.totalorder %s27, 1
      %p202 = por %p200, %p201
      %p204 = scmp.ne.s32.totalorder %s187, %s203
      %p205 = scmp.eq.s32.totalorder %s27, 0
      %p206 = por %p204, %p205
      %p207 = scmp.le.s32.totalorder 1, %s21
      %p208 = scmp.lt.s32.totalorder %s21, 3
      %p209 = pnand %p207, %p208
      %p210 = pneg %p209
      // Predicated region
      $region9: #{tpu_custom_call.1} parent=5 // pred_check
        _
      $region10: #{tpu_custom_call.1} parent=5 // pred_check_branch
        %212 = sbr.rel (%p209) target = $region12
      $region11: #{tpu_custom_call.1} parent=5 // pred_region
        %s213 = ssub.s32 %s21, 1
        // Predicated region
        $region13: #{tpu_custom_call.1} parent=11 // pred_check
          %p214 = pneg %p68
        $region14: #{tpu_custom_call.1} parent=11 // pred_check_branch
          %216 = sbr.rel (%p214) target = $region16
        $region15: #{tpu_custom_call.1} parent=11 // pred_region
          %218 = vsyncadd [#allocation6], 0
          %s220 = sshll.u32 %s1, 4
          %s221 = int_to_ptr.hbm [resolvable:$true] %s220
          %s222 = sshll.u32 [#allocation5], 4
          %s223 = int_to_ptr.vmem [resolvable:$true] %s222
          %225 = dma.hbm_to_vmem [thread:$0]  %s221, 128, %s223, [#allocation6]
        $region16: #{tpu_custom_call.1} parent=11 // pred_fallthru
          _
        // Predicated region
        $region17: #{tpu_custom_call.1} parent=11 // pred_check
          %p226 = pneg %p89
        $region18: #{tpu_custom_call.1} parent=11 // pred_check_branch
          %228 = sbr.rel (%p226) target = $region20
        $region19: #{tpu_custom_call.1} parent=11 // pred_region
          %230 = vsyncadd [#allocation6], 0
          %s231 = sshll.u32 %s2, 4
          %s232 = int_to_ptr.hbm [resolvable:$true] %s231
          %s233 = sshll.u32 [#allocation7], 4
          %s234 = int_to_ptr.vmem [resolvable:$true] %s233
          %239 = dma.hbm_to_vmem [thread:$0]  %s232, 1024, %s234, [#allocation6], 64, 64, 4
        $region20: #{tpu_custom_call.1} parent=11 // pred_fallthru
          _
        // Predicated region
        $region21: #{tpu_custom_call.1} parent=11 // pred_check
          %p240 = pneg %p110
        $region22: #{tpu_custom_call.1} parent=11 // pred_check_branch
          %242 = sbr.rel (%p240) target = $region24
        $region23: #{tpu_custom_call.1} parent=11 // pred_region
          _
        $region24: #{tpu_custom_call.1} parent=11 // pred_fallthru
          _
        // Predicated region
        $region25: #{tpu_custom_call.1} parent=11 // pred_check
          %p243 = pneg %p131
        $region26: #{tpu_custom_call.1} parent=11 // pred_check_branch
          %245 = sbr.rel (%p243) target = $region28
        $region27: #{tpu_custom_call.1} parent=11 // pred_region
          %247 = vsyncadd [#allocation9], 0
          %s248 = sshll.u32 %s4, 4
          %s249 = int_to_ptr.hbm [resolvable:$true] %s248
          %s250 = sshll.u32 [#allocation8], 4
          %s251 = int_to_ptr.vmem [resolvable:$true] %s250
          %256 = dma.hbm_to_vmem [thread:$0]  %s249, 1024, %s251, [#allocation9], 64, 64, 4
        $region28: #{tpu_custom_call.1} parent=11 // pred_fallthru
          _
        // Predicated region
        $region29: #{tpu_custom_call.1} parent=11 // pred_check
          %p257 = pneg %p152
        $region30: #{tpu_custom_call.1} parent=11 // pred_check_branch
          %259 = sbr.rel (%p257) target = $region32
        $region31: #{tpu_custom_call.1} parent=11 // pred_region
          _
        $region32: #{tpu_custom_call.1} parent=11 // pred_fallthru
          _
        // Predicated region
        $region33: #{tpu_custom_call.1} parent=11 // pred_check
          %p260 = pneg %p173
        $region34: #{tpu_custom_call.1} parent=11 // pred_check_branch
          %262 = sbr.rel (%p260) target = $region36
        $region35: #{tpu_custom_call.1} parent=11 // pred_region
          %264 = vsyncadd [#allocation9], 0
          %s265 = sshll.u32 %s6, 4
          %s266 = int_to_ptr.hbm [resolvable:$true] %s265
          %s267 = sshll.u32 [#allocation10], 4
          %s268 = int_to_ptr.vmem [resolvable:$true] %s267
          %273 = dma.hbm_to_vmem [thread:$0]  %s266, 2048, %s268, [#allocation9], 128, 128, 8
        $region36: #{tpu_custom_call.1} parent=11 // pred_fallthru
          _
      $region12: #{tpu_custom_call.1} parent=5 // pred_fallthru
        _
      %p274 = scmp.lt.s32.totalorder %s21, 2
      // Predicated region
      $region37: #{tpu_custom_call.1} parent=5 // pred_check
        %p275 = pneg %p274
      $region38: #{tpu_custom_call.1} parent=5 // pred_check_branch
        %277 = sbr.rel (%p275) target = $region40
      $region39: #{tpu_custom_call.1} parent=5 // pred_region
        // Predicated region
        $region41: #{tpu_custom_call.1} parent=39 // pred_check
          %p278 = pneg %p41
        $region42: #{tpu_custom_call.1} parent=39 // pred_check_branch
          %280 = sbr.rel (%p278) target = $region44
        $region43: #{tpu_custom_call.1} parent=39 // pred_region
          %s281 = sand.u32 %s31, 1
          %s282 = scalar_lea.sflag [#allocation3], %s281
          %s283 = sand.u32 %s31, 1
          %s284 = smul.addr %s283, 8
          %s285 = scalar_lea.vmem [#allocation2], %s284
          %287 = vsyncadd %s282, 0
          %s288 = smul.addr %s21, 8
          %s289 = scalar_lea.hbm %s0, %s288
          %s291 = sshll.u32 %s289, 4
          %s292 = int_to_ptr.hbm [resolvable:$true] %s291
          %s293 = sshll.u32 %s285, 4
          %s294 = int_to_ptr.vmem [resolvable:$true] %s293
          %296 = dma.hbm_to_vmem [thread:$0]  %s292, 128, %s294, %s282
        $region44: #{tpu_custom_call.1} parent=39 // pred_fallthru
          _
      $region40: #{tpu_custom_call.1} parent=5 // pred_fallthru
        _
      %p297 = scmp.le.s32.totalorder 1, %s21
      %p298 = scmp.lt.s32.totalorder %s21, 3
      %p299 = pnand %p297, %p298
      %p300 = pneg %p299
      // Predicated region
      $region45: #{tpu_custom_call.1} parent=5 // pred_check
        _
      $region46: #{tpu_custom_call.1} parent=5 // pred_check_branch
        %302 = sbr.rel (%p299) target = $region48
      $region47: #{tpu_custom_call.1} parent=5 // pred_region
        %s303 = ssub.s32 %s21, 1
        %s304 = sand.u32 %s34, 1
        %s305 = scalar_lea.sflag [#allocation3], %s304
        %s306 = sand.u32 %s34, 1
        %s307 = smul.addr %s306, 8
        %s308 = scalar_lea.vmem [#allocation2], %s307
        // Predicated region
        $region49: #{tpu_custom_call.1} parent=47 // pred_check
          %p309 = pneg %p47
        $region50: #{tpu_custom_call.1} parent=47 // pred_check_branch
          %311 = sbr.rel (%p309) target = $region52
        $region51: #{tpu_custom_call.1} parent=47 // pred_region
          %313 = dma.done %s305, 128
        $region52: #{tpu_custom_call.1} parent=47 // pred_fallthru
          _
        // Predicated region
        $region53: #{tpu_custom_call.1} parent=47 // pred_check
          %p314 = pneg %p68
        $region54: #{tpu_custom_call.1} parent=47 // pred_check_branch
          %316 = sbr.rel (%p314) target = $region56
        $region55: #{tpu_custom_call.1} parent=47 // pred_region
          %318 = dma.done [#allocation6], 128
        $region56: #{tpu_custom_call.1} parent=47 // pred_fallthru
          _
        // Predicated region
        $region57: #{tpu_custom_call.1} parent=47 // pred_check
          %p319 = pneg %p89
        $region58: #{tpu_custom_call.1} parent=47 // pred_check_branch
          %321 = sbr.rel (%p319) target = $region60
        $region59: #{tpu_custom_call.1} parent=47 // pred_region
          %323 = dma.done [#allocation6], 1024
        $region60: #{tpu_custom_call.1} parent=47 // pred_fallthru
          _
        // Predicated region
        $region61: #{tpu_custom_call.1} parent=47 // pred_check
          %p324 = pneg %p131
        $region62: #{tpu_custom_call.1} parent=47 // pred_check_branch
          %326 = sbr.rel (%p324) target = $region64
        $region63: #{tpu_custom_call.1} parent=47 // pred_region
          %328 = dma.done [#allocation9], 1024
        $region64: #{tpu_custom_call.1} parent=47 // pred_fallthru
          _
        // Predicated region
        $region65: #{tpu_custom_call.1} parent=47 // pred_check
          %p329 = pneg %p173
        $region66: #{tpu_custom_call.1} parent=47 // pred_check_branch
          %331 = sbr.rel (%p329) target = $region68
        $region67: #{tpu_custom_call.1} parent=47 // pred_region
          %333 = dma.done [#allocation9], 2048
        $region68: #{tpu_custom_call.1} parent=47 // pred_fallthru
          _
        %s334 = sand.u32 %s34, 1
        %s335 = scalar_lea.sflag [#allocation3], %s334
        %s336 = sand.u32 %s34, 1
        %s337 = smul.addr %s336, 8
        %s338 = scalar_lea.vmem [#allocation2], %s337
        %p339 = pneg %p47
        %p340 = pneg %p44
        %p341 = pneg %p68
        %p342 = pneg %p65
        %p343 = pneg %p89
        %p344 = pneg %p86
        %p345 = pneg %p110
        %p346 = pneg %p107
        %p347 = pneg %p131
        %p348 = pneg %p128
        %p349 = pneg %p152
        %p350 = pneg %p149
        %p351 = pneg %p173
        %p352 = pneg %p170
        %p353 = pneg %p199
        %p354 = pneg %p196
        %s355 = sand.u32 %s186, 1
        %s356 = scalar_lea.sflag [#allocation4], %s355
        %s357 = sand.u32 %s186, 1
        %s358 = smul.addr %s357, 8
        %s359 = scalar_lea.vmem [#allocation11], %s358
        %v360 = vld [vmem:[%s308] sm:$0xff]
        %v361 = vld [vmem:[#allocation5] sm:$0xff]
        %362 = vxpose.xlu0.b32.start [1/16] %v360, 128
        %363 = vxpose.xlu0.b32.cont [2/16] 0.0, 128
        %364 = vxpose.xlu0.b32.cont [3/16] 0.0, 128
        %365 = vxpose.xlu0.b32.cont [4/16] 0.0, 128
        %366 = vxpose.xlu0.b32.cont [5/16] 0.0, 128
        %367 = vxpose.xlu0.b32.cont [6/16] 0.0, 128
        %368 = vxpose.xlu0.b32.cont [7/16] 0.0, 128
        %369 = vxpose.xlu0.b32.cont [8/16] 0.0, 128
        %370 = vxpose.xlu0.b32.cont [9/16] 0.0, 128
        %371 = vxpose.xlu0.b32.cont [10/16] 0.0, 128
        %372 = vxpose.xlu0.b32.cont [11/16] 0.0, 128
        %373 = vxpose.xlu0.b32.cont [12/16] 0.0, 128
        %374 = vxpose.xlu0.b32.cont [13/16] 0.0, 128
        %375 = vxpose.xlu0.b32.cont [14/16] 0.0, 128
        %376 = vxpose.xlu0.b32.cont [15/16] 0.0, 128
        %377 = vxpose.xlu0.b32.end [16/16] 0.0, 128
        %v378 = vpop.trf.xlu0
        %v379 = vpop.trf.xlu0
        %v380 = vpop.trf.xlu0
        %v381 = vpop.trf.xlu0
        %v382 = vpop.trf.xlu0
        %v383 = vpop.trf.xlu0
        %v384 = vpop.trf.xlu0
        %v385 = vpop.trf.xlu0
        %v386 = vpop.trf.xlu0
        %v387 = vpop.trf.xlu0
        %v388 = vpop.trf.xlu0
        %v389 = vpop.trf.xlu0
        %v390 = vpop.trf.xlu0
        %v391 = vpop.trf.xlu0
        %v392 = vpop.trf.xlu0
        %v393 = vpop.trf.xlu0
        %vm394 = vcmask 64512
        %v396 = vsel %vm394, %v378, 0
        %398 = vmatpush.msra.mxu0 0.0
        %399 = vmatpush.msra.mxu0 0.0
        %400 = vmatpush.msra.mxu0 0.0
        %401 = vmatpush.msra.mxu0 0.0
        %402 = vmatpush.msra.mxu0 0.0
        %403 = vmatpush.msra.mxu0 0.0
        %404 = vmatpush.msra.mxu0 0.0
        %405 = vmatpush.msra.mxu0 0.0
        %406 = vmatpush.msra.mxu0 0.0
        %407 = vmatpush.msra.mxu0 0.0
        %408 = vmatpush.msra.mxu0 0.0
        %409 = vmatpush.msra.mxu0 0.0
        %410 = vmatpush.msra.mxu0 0.0
        %411 = vmatpush.msra.mxu0 0.0
        %412 = vmatpush.msra.mxu0 0.0
        %413 = vmatpush.msra.mxu0 %v361
        %414 = vmatmul.f32.gmra.mxu0 %v396
        %v415 = vpop.f32.mrf.mxu0
        %v416 = vadd.f32 0.0, %v415
        %417 = vdwg.mxu0
        %v418 = vmax.f32 %v416, 0.0
        %v419 = vpack.c.bf16 %v418, %v418
        %v420 = vld [vmem:[#allocation7] sm:$0xf]
        %v421 = vld [vmem:[#allocation7 + $0x4] sm:$0xf]
        %v422 = vld [vmem:[#allocation7 + $0x8] sm:$0xf]
        %v423 = vld [vmem:[#allocation7 + $0xc] sm:$0xf]
        %v424 = vld [vmem:[#allocation7 + $0x10] sm:$0xf]
        %v425 = vld [vmem:[#allocation7 + $0x14] sm:$0xf]
        %v426 = vld [vmem:[#allocation7 + $0x18] sm:$0xf]
        %v427 = vld [vmem:[#allocation7 + $0x1c] sm:$0xf]
        %v428 = vld [vmem:[#allocation7 + $0x20] sm:$0xf]
        %v429 = vld [vmem:[#allocation7 + $0x24] sm:$0xf]
        %v430 = vld [vmem:[#allocation7 + $0x28] sm:$0xf]
        %v431 = vld [vmem:[#allocation7 + $0x2c] sm:$0xf]
        %v432 = vld [vmem:[#allocation7 + $0x30] sm:$0xf]
        %v433 = vld [vmem:[#allocation7 + $0x34] sm:$0xf]
        %v434 = vld [vmem:[#allocation7 + $0x38] sm:$0xf]
        %v435 = vld [vmem:[#allocation7 + $0x3c] sm:$0xf]
        %v436 = vld [vmem:[%s3] sm:$0x1]
        %v438 = vperm.slane %v436, 0
        %v456 = vunpack.c.l.b16 %v420
        %v457 = vunpack.c.l.b16 %v421
        %v458 = vunpack.c.l.b16 %v422
        %v459 = vunpack.c.l.b16 %v423
        %v460 = vunpack.c.l.b16 %v424
        %v461 = vunpack.c.l.b16 %v425
        %v462 = vunpack.c.l.b16 %v426
        %v463 = vunpack.c.l.b16 %v427
        %v464 = vunpack.c.l.b16 %v428
        %v465 = vunpack.c.l.b16 %v429
        %v466 = vunpack.c.l.b16 %v430
        %v467 = vunpack.c.l.b16 %v431
        %v468 = vunpack.c.l.b16 %v432
        %v469 = vunpack.c.l.b16 %v433
        %v470 = vunpack.c.l.b16 %v434
        %v471 = vunpack.c.l.b16 %v435
        %v472 = vpack.c.b16 %v457, %v456
        %v473 = vpack.c.b16 %v459, %v458
        %v474 = vpack.c.b16 %v461, %v460
        %v475 = vpack.c.b16 %v463, %v462
        %v476 = vpack.c.b16 %v465, %v464
        %v477 = vpack.c.b16 %v467, %v466
        %v478 = vpack.c.b16 %v469, %v468
        %v479 = vpack.c.b16 %v471, %v470
        %488 = vmatpush.bf16.msra.mxu0 %v479
        %489 = vmatpush.bf16.msra.mxu0 %v478
        %490 = vmatpush.bf16.msra.mxu0 %v477
        %491 = vmatpush.bf16.msra.mxu0 %v476
        %492 = vmatpush.bf16.msra.mxu0 %v475
        %493 = vmatpush.bf16.msra.mxu0 %v474
        %494 = vmatpush.bf16.msra.mxu0 %v473
        %495 = vmatpush.bf16.msra.mxu0 %v472
        %496 = vmatmul.bf16.gmra.mxu0 %v419
        %v497 = vpop.f32.mrf.mxu0
        %v498 = vadd.f32 %v438, %v497
        %v499 = vpop.f32.mrf.mxu0
        %500 = vdwg.mxu0
        %v501 = vmax.f32 %v498, 0.0
        %v502 = vpack.c.bf16 %v501, %v501
        %v503 = vld [vmem:[#allocation8] sm:$0xf]
        %v504 = vld [vmem:[#allocation8 + $0x4] sm:$0xf]
        %v505 = vld [vmem:[#allocation8 + $0x8] sm:$0xf]
        %v506 = vld [vmem:[#allocation8 + $0xc] sm:$0xf]
        %v507 = vld [vmem:[#allocation8 + $0x10] sm:$0xf]
        %v508 = vld [vmem:[#allocation8 + $0x14] sm:$0xf]
        %v509 = vld [vmem:[#allocation8 + $0x18] sm:$0xf]
        %v510 = vld [vmem:[#allocation8 + $0x1c] sm:$0xf]
        %v511 = vld [vmem:[#allocation8 + $0x20] sm:$0xf]
        %v512 = vld [vmem:[#allocation8 + $0x24] sm:$0xf]
        %v513 = vld [vmem:[#allocation8 + $0x28] sm:$0xf]
        %v514 = vld [vmem:[#allocation8 + $0x2c] sm:$0xf]
        %v515 = vld [vmem:[#allocation8 + $0x30] sm:$0xf]
        %v516 = vld [vmem:[#allocation8 + $0x34] sm:$0xf]
        %v517 = vld [vmem:[#allocation8 + $0x38] sm:$0xf]
        %v518 = vld [vmem:[#allocation8 + $0x3c] sm:$0xf]
        %v519 = vld [vmem:[%s5] sm:$0x1]
        %v521 = vperm.slane %v519, 0
        %v539 = vunpack.c.l.b16 %v503
        %v540 = vunpack.c.l.b16 %v504
        %v541 = vunpack.c.l.b16 %v505
        %v542 = vunpack.c.l.b16 %v506
        %v543 = vunpack.c.l.b16 %v507
        %v544 = vunpack.c.l.b16 %v508
        %v545 = vunpack.c.l.b16 %v509
        %v546 = vunpack.c.l.b16 %v510
        %v547 = vunpack.c.l.b16 %v511
        %v548 = vunpack.c.l.b16 %v512
        %v549 = vunpack.c.l.b16 %v513
        %v550 = vunpack.c.l.b16 %v514
        %v551 = vunpack.c.l.b16 %v515
        %v552 = vunpack.c.l.b16 %v516
        %v553 = vunpack.c.l.b16 %v517
        %v554 = vunpack.c.l.b16 %v518
        %v555 = vpack.c.b16 %v540, %v539
        %v556 = vpack.c.b16 %v542, %v541
        %v557 = vpack.c.b16 %v544, %v543
        %v558 = vpack.c.b16 %v546, %v545
        %v559 = vpack.c.b16 %v548, %v547
        %v560 = vpack.c.b16 %v550, %v549
        %v561 = vpack.c.b16 %v552, %v551
        %v562 = vpack.c.b16 %v554, %v553
        %571 = vmatpush.bf16.msra.mxu0 %v562
        %572 = vmatpush.bf16.msra.mxu0 %v561
        %573 = vmatpush.bf16.msra.mxu0 %v560
        %574 = vmatpush.bf16.msra.mxu0 %v559
        %575 = vmatpush.bf16.msra.mxu0 %v558
        %576 = vmatpush.bf16.msra.mxu0 %v557
        %577 = vmatpush.bf16.msra.mxu0 %v556
        %578 = vmatpush.bf16.msra.mxu0 %v555
        %579 = vmatmul.bf16.gmra.mxu0 %v502
        %v580 = vpop.f32.mrf.mxu0
        %v581 = vadd.f32 %v521, %v580
        %v582 = vpop.f32.mrf.mxu0
        %583 = vdwg.mxu0
        %v584 = vmul.f32 %v581, %v581
        %585 = vadd.xlane.f32.xlu0 %v584
        %v586 = vpop.xlane.xlu0 %585
        %v587 = vpack.c.bf16 %v581, %v581
        %v588 = vld [vmem:[#allocation10] sm:$0xff]
        %v589 = vld [vmem:[#allocation10 + $0x8] sm:$0xff]
        %v590 = vld [vmem:[#allocation10 + $0x10] sm:$0xff]
        %v591 = vld [vmem:[#allocation10 + $0x18] sm:$0xff]
        %v592 = vld [vmem:[#allocation10 + $0x20] sm:$0xff]
        %v593 = vld [vmem:[#allocation10 + $0x28] sm:$0xff]
        %v594 = vld [vmem:[#allocation10 + $0x30] sm:$0xff]
        %v595 = vld [vmem:[#allocation10 + $0x38] sm:$0xff]
        %v596 = vld [vmem:[#allocation10 + $0x40] sm:$0xff]
        %v597 = vld [vmem:[#allocation10 + $0x48] sm:$0xff]
        %v598 = vld [vmem:[#allocation10 + $0x50] sm:$0xff]
        %v599 = vld [vmem:[#allocation10 + $0x58] sm:$0xff]
        %v600 = vld [vmem:[#allocation10 + $0x60] sm:$0xff]
        %v601 = vld [vmem:[#allocation10 + $0x68] sm:$0xff]
        %v602 = vld [vmem:[#allocation10 + $0x70] sm:$0xff]
        %v603 = vld [vmem:[#allocation10 + $0x78] sm:$0xff]
        %v620 = vunpack.c.l.b16 %v588
        %v621 = vunpack.c.h.b16 %v588
        %v622 = vunpack.c.l.b16 %v589
        %v623 = vunpack.c.h.b16 %v589
        %v624 = vunpack.c.l.b16 %v590
        %v625 = vunpack.c.h.b16 %v590
        %v626 = vunpack.c.l.b16 %v591
        %v627 = vunpack.c.h.b16 %v591
        %v628 = vunpack.c.l.b16 %v592
        %v629 = vunpack.c.h.b16 %v592
        %v630 = vunpack.c.l.b16 %v593
        %v631 = vunpack.c.h.b16 %v593
        %v632 = vunpack.c.l.b16 %v594
        %v633 = vunpack.c.h.b16 %v594
        %v634 = vunpack.c.l.b16 %v595
        %v635 = vunpack.c.h.b16 %v595
        %v636 = vunpack.c.l.b16 %v596
        %v637 = vunpack.c.h.b16 %v596
        %v638 = vunpack.c.l.b16 %v597
        %v639 = vunpack.c.h.b16 %v597
        %v640 = vunpack.c.l.b16 %v598
        %v641 = vunpack.c.h.b16 %v598
        %v642 = vunpack.c.l.b16 %v599
        %v643 = vunpack.c.h.b16 %v599
        %v644 = vunpack.c.l.b16 %v600
        %v645 = vunpack.c.h.b16 %v600
        %v646 = vunpack.c.l.b16 %v601
        %v647 = vunpack.c.h.b16 %v601
        %v648 = vunpack.c.l.b16 %v602
        %v649 = vunpack.c.h.b16 %v602
        %v650 = vunpack.c.l.b16 %v603
        %v651 = vunpack.c.h.b16 %v603
        %v652 = vpack.c.b16 %v622, %v620
        %v653 = vpack.c.b16 %v623, %v621
        %v654 = vpack.c.b16 %v626, %v624
        %v655 = vpack.c.b16 %v627, %v625
        %v656 = vpack.c.b16 %v630, %v628
        %v657 = vpack.c.b16 %v631, %v629
        %v658 = vpack.c.b16 %v634, %v632
        %v659 = vpack.c.b16 %v635, %v633
        %v660 = vpack.c.b16 %v638, %v636
        %v661 = vpack.c.b16 %v639, %v637
        %v662 = vpack.c.b16 %v642, %v640
        %v663 = vpack.c.b16 %v643, %v641
        %v664 = vpack.c.b16 %v646, %v644
        %v665 = vpack.c.b16 %v647, %v645
        %v666 = vpack.c.b16 %v650, %v648
        %v667 = vpack.c.b16 %v651, %v649
        %684 = vmatpush.bf16.msra.mxu0 %v666
        %685 = vmatpush.bf16.msra.mxu0 %v664
        %686 = vmatpush.bf16.msra.mxu0 %v662
        %687 = vmatpush.bf16.msra.mxu0 %v660
        %688 = vmatpush.bf16.msra.mxu0 %v658
        %689 = vmatpush.bf16.msra.mxu0 %v656
        %690 = vmatpush.bf16.msra.mxu0 %v654
        %691 = vmatpush.bf16.msra.mxu0 %v652
        %692 = vmatmul.bf16.gmra.mxu0 %v587
        %v693 = vpop.f32.mrf.mxu0
        %v694 = vadd.f32 0.0, %v693
        %v695 = vpop.f32.mrf.mxu0
        %696 = vdwg.mxu0
        %697 = vmatpush.bf16.msra.mxu0 %v667
        %698 = vmatpush.bf16.msra.mxu0 %v665
        %699 = vmatpush.bf16.msra.mxu0 %v663
        %700 = vmatpush.bf16.msra.mxu0 %v661
        %701 = vmatpush.bf16.msra.mxu0 %v659
        %702 = vmatpush.bf16.msra.mxu0 %v657
        %703 = vmatpush.bf16.msra.mxu0 %v655
        %704 = vmatpush.bf16.msra.mxu0 %v653
        %705 = vmatmul.bf16.gmra.mxu0 %v587
        %v706 = vpop.f32.mrf.mxu0
        %v707 = vadd.f32 0.0, %v706
        %v708 = vpop.f32.mrf.mxu0
        %709 = vdwg.mxu0
        %v710 = vmul.f32 %v586, 2.0
        %v711 = vmax.f32 %v710, 1e-20
        %v712 = vrcp.pop %v711
        %v713 = vmul.f32 %v711, %v712
        %v714 = vsub.f32 2.0, %v713
        %v715 = vmul.f32 %v712, %v714
        %v716 = vmul.f32 %v694, %v694
        %v717 = vmul.f32 %v707, %v707
        %v718 = vadd.f32 %v716, %v717
        %v719 = vmul.f32 %v718, %v715
        %v720 = vmul.f32 %v719, 0.04
        %v721 = vadd.f32 %v720, 1e-05
        %v722 = vlog2.pop %v721
        %v723 = vmul.f32 %v722, 0.6931472
        %724 = vst [vmem:[%s359] sm:$0xff] %v723
        %s725 = sand.u32 %s186, 1
        %s726 = scalar_lea.sflag [#allocation4], %s725
        %s727 = sand.u32 %s186, 1
        %s728 = smul.addr %s727, 8
        %s729 = scalar_lea.vmem [#allocation11], %s728
        // Predicated region
        $region69: #{tpu_custom_call.1} parent=47 // pred_check
          %p730 = pneg %p196
        $region70: #{tpu_custom_call.1} parent=47 // pred_check_branch
          %732 = sbr.rel (%p730) target = $region72
        $region71: #{tpu_custom_call.1} parent=47 // pred_region
          %734 = vsyncadd %s726, 0
          %s735 = smul.addr %s26, 8
          %s736 = scalar_lea.hbm %s7, %s735
          %s738 = sshll.u32 %s729, 4
          %s739 = int_to_ptr.vmem [resolvable:$true] %s738
          %s740 = sshll.u32 %s736, 4
          %s741 = int_to_ptr.hbm [resolvable:$true] %s740
          %743 = dma.vmem_to_hbm [thread:$0]  %s739, 128, %s741, %s726
        $region72: #{tpu_custom_call.1} parent=47 // pred_fallthru
          _
      $region48: #{tpu_custom_call.1} parent=5 // pred_fallthru
        _
      %p744 = scmp.le.s32.totalorder 2, %s21
      // Predicated region
      $region73: #{tpu_custom_call.1} parent=5 // pred_check
        %p745 = pneg %p744
      $region74: #{tpu_custom_call.1} parent=5 // pred_check_branch
        %747 = sbr.rel (%p745) target = $region76
      $region75: #{tpu_custom_call.1} parent=5 // pred_region
        %s748 = ssub.s32 %s21, 2
        // Predicated region
        $region77: #{tpu_custom_call.1} parent=75 // pred_check
          %p749 = pneg %p202
        $region78: #{tpu_custom_call.1} parent=75 // pred_check_branch
          %751 = sbr.rel (%p749) target = $region80
        $region79: #{tpu_custom_call.1} parent=75 // pred_region
          %s752 = sand.u32 %s187, 1
          %s753 = scalar_lea.sflag [#allocation4], %s752
          %s754 = sand.u32 %s187, 1
          %s755 = smul.addr %s754, 8
          %s756 = scalar_lea.vmem [#allocation11], %s755
          %758 = dma.done %s753, 128
        $region80: #{tpu_custom_call.1} parent=75 // pred_fallthru
          _
      $region76: #{tpu_custom_call.1} parent=5 // pred_fallthru
        _
    $region6: #{tpu_custom_call.1} parent=1 // loop_footer
      %s25 = sadd.s32 1, %s21
    $region7: #{tpu_custom_call.1} parent=1 // loop_footer_branch
      %20 = sbr.rel target = $region3
    $region8: #{tpu_custom_call.1} parent=1 // loop_exit
      _
    %759 = vsyncpa [#allocation3], 1
    %s760 = scalar_lea.sflag [#allocation3], 1
    %761 = vsyncpa %s760, 1
    %762 = vsyncpa [#allocation6], 1
    %763 = vsyncpa [#allocation9], 1
    %764 = vsyncpa [#allocation4], 1
    %s765 = scalar_lea.sflag [#allocation4], 1
    %766 = vsyncpa %s765, 1

</llo_original>
